<compile_context>
chip_gen: v7x
topology: tpu7x:2x2x1
jax: 0.10.0
libtpu: 0.0.40
codegen_flags: <defaults>
</compile_context>

<pallas_src>
import functools
import numpy as np
import jax
import jax.numpy as jnp
from jax import lax
from jax.experimental import pallas as pl
from jax.experimental.pallas import tpu as pltpu

LN_EPS = 1e-5
_VMEM_LIMIT = 48 * 1024 * 1024      # fits v5e/v6e (128 MiB phys) and leaves headroom on v7x (64 MiB)


def _cparams(n_axes):
    return pltpu.CompilerParams(
        dimension_semantics=("parallel",) * n_axes,
        vmem_limit_bytes=_VMEM_LIMIT)


def _bf16(a):
    return a.astype(jnp.bfloat16)


def _row_plan(m):
    """Row tile + padded row count for row-wise gridded kernels."""
    if m <= 512:
        return m, m
    for t in (512, 448, 384, 320, 256):
        if m % t == 0:
            return t, m
    t = 256
    return t, ((m + t - 1) // t) * t   # pad + mask (padded rows sliced off after the call)


def _pad_rows(x, m_pad):
    m = x.shape[0]
    if m_pad == m:
        return x
    return jnp.pad(x, ((0, m_pad - m), (0, 0)))


def _win_tile(n_windows, n_tok):
    """Windows per attention grid step: largest divisor with wt*N <= 512 rows."""
    best = 1
    for wt in range(1, n_windows + 1):
        if n_windows % wt == 0 and wt * n_tok <= 512:
            best = wt
    return best


def _head_tile(hw):
    cap = min(hw, 2048)
    for t in range(cap, 0, -1):
        if hw % t == 0 and (t == hw or t % 128 == 0):
            return t
    return hw


def _ln(x, g, b, eps):
    mu = jnp.mean(x, axis=-1, keepdims=True)
    xc = x - mu
    var = jnp.mean(xc * xc, axis=-1, keepdims=True)
    return xc * lax.rsqrt(var + eps) * g + b


# ----------------------------------------------------------------------------
# Fused Pallas kernels
# ----------------------------------------------------------------------------
def _attn_block_kernel(x_ref, g_ref, b_ref, qkvw_ref, qkvb_ref, pw_ref, pb_ref,
                       relb_ref, *rest, num_heads, scale, eps, has_mask, wt, n_tok):
    # WT windows per grid step.  LN1 + QKV + window MHA + proj + residual fused.
    if has_mask:
        mask_ref, o_ref = rest
    else:
        (o_ref,) = rest

    x = x_ref[0]                                          # (wt, N, C) f32
    C = x.shape[-1]
    hd = C // num_heads
    xf = x.reshape(wt * n_tok, C)                         # (M, C) f32
    xn = _ln(xf, g_ref[...], b_ref[...], eps)             # f32 LN stats

    # One lane-dense (M, 3C) matmul (bf16 operands, f32 accumulation).
    qkv = jnp.dot(xn.astype(jnp.bfloat16), qkvw_ref[...],
                  preferred_element_type=jnp.float32) + qkvb_ref[...]

    ctx_heads = []
    for h in range(num_heads):
        q = qkv[:, h * hd:(h + 1) * hd].reshape(wt, n_tok, hd)
        k = qkv[:, C + h * hd:C + (h + 1) * hd].reshape(wt, n_tok, hd)
        v = qkv[:, 2 * C + h * hd:2 * C + (h + 1) * hd].reshape(wt, n_tok, hd)
        s = jnp.einsum('wqd,wkd->wqk', q.astype(jnp.bfloat16), k.astype(jnp.bfloat16),
                       preferred_element_type=jnp.float32)            # (wt, N, N) f32
        s = s * scale + relb_ref[h]
        if has_mask:
            s = s + mask_ref[...]
        s = s - jnp.max(s, axis=-1, keepdims=True)
        p = jnp.exp(s)
        p = p * pl.reciprocal(jnp.sum(p, axis=-1, keepdims=True), approx=True)
        ctx = jnp.einsum('wqk,wkd->wqd', p.astype(jnp.bfloat16), v.astype(jnp.bfloat16),
                         preferred_element_type=jnp.float32)           # (wt, N, hd)
        ctx_heads.append(ctx.reshape(wt * n_tok, hd))

    ctx_all = jnp.concatenate(ctx_heads, axis=-1)                      # (M, C)
    y = jnp.dot(ctx_all.astype(jnp.bfloat16), pw_ref[...],
                preferred_element_type=jnp.float32) + pb_ref[...]
    o_ref[0] = (xf + y).reshape(wt, n_tok, C).astype(o_ref.dtype)


def _mlp_block_kernel(x_ref, g_ref, b_ref, w1_ref, b1_ref, w2_ref, b2_ref, o_ref, *, eps):
    x = x_ref[...]
    xn = _ln(x, g_ref[...], b_ref[...], eps)
    h = jnp.dot(xn.astype(jnp.bfloat16), w1_ref[...],
                preferred_element_type=jnp.float32) + b1_ref[...]
    # TODO(synk): PyTorch nn.GELU default is exact erf GELU; tanh approx used for EUP lowering.
    h = jax.nn.gelu(h, approximate=True)
    y = jnp.dot(h.astype(jnp.bfloat16), w2_ref[...],
                preferred_element_type=jnp.float32) + b2_ref[...]
    o_ref[...] = (x + y).astype(o_ref.dtype)


def _ln_linear_kernel(x_ref, g_ref, gb_ref, w_ref, bias_ref, o_ref, *, eps, do_ln):
    x = x_ref[...]
    if do_ln:
        x = _ln(x, g_ref[...], gb_ref[...], eps)
    y = jnp.dot(x.astype(jnp.bfloat16), w_ref[...],
                preferred_element_type=jnp.float32) + bias_ref[...]
    o_ref[...] = y.astype(o_ref.dtype)


def _linear_ln_kernel(x_ref, w_ref, bias_ref, g_ref, gb_ref, o_ref, *, eps, do_ln):
    y = jnp.dot(x_ref[...].astype(jnp.bfloat16), w_ref[...],
                preferred_element_type=jnp.float32) + bias_ref[...]
    if do_ln:
        y = _ln(y, g_ref[...], gb_ref[...], eps)
    o_ref[...] = y.astype(o_ref.dtype)


def _ln_concat_linear_kernel(t_ref, s_ref, g_ref, gb_ref, w_ref, bias_ref, o_ref,
                             *, eps, dsplit):
    # out = concat([LN(t), skip]) @ W + b  ==  LN(t) @ W[:D] + skip @ W[D:] + b
    t = _ln(t_ref[...], g_ref[...], gb_ref[...], eps)
    y = (jnp.dot(t.astype(jnp.bfloat16), w_ref[0:dsplit, :],
                 preferred_element_type=jnp.float32)
         + jnp.dot(s_ref[...].astype(jnp.bfloat16), w_ref[dsplit:2 * dsplit, :],
                   preferred_element_type=jnp.float32)
         + bias_ref[...])
    o_ref[...] = y.astype(o_ref.dtype)


def _head_kernel(f_ref, g_ref, gb_ref, w_ref, r_ref, o_ref, *, eps):
    # LN -> 1x1 conv (num_classes=1) -> tanh -> + residual; lane-dense (1, T) stores.
    f = f_ref[0]                                        # (T, D)
    fn = _ln(f, g_ref[...], gb_ref[...], eps)
    logits = lax.dot_general(w_ref[...], fn, (((1,), (1,)), ((), ())),
                             preferred_element_type=jnp.float32)    # (1, T)
    o_ref[0] = (jnp.tanh(logits) + r_ref[0]).astype(o_ref.dtype)


# ----------------------------------------------------------------------------
# pallas_call wrappers
# ----------------------------------------------------------------------------
def fused_window_attn_block(xw, p, num_heads):
    B, nW, N, C = xw.shape
    ap = p["attn"]
    hd = C // num_heads
    scale = hd ** -0.5
    mask = p["attn_mask"]
    has_mask = mask is not None
    wt = _win_tile(nW, N)

    kern = functools.partial(_attn_block_kernel, num_heads=num_heads, scale=scale,
                             eps=LN_EPS, has_mask=has_mask, wt=wt, n_tok=N)

    in_specs = [
        pl.BlockSpec((1, wt, N, C), lambda b, w: (b, w, 0, 0)),
        pl.BlockSpec((1, C), lambda b, w: (0, 0)),
        pl.BlockSpec((1, C), lambda b, w: (0, 0)),
        pl.BlockSpec((C, 3 * C), lambda b, w: (0, 0)),
        pl.BlockSpec((1, 3 * C), lambda b, w: (0, 0)),
        pl.BlockSpec((C, C), lambda b, w: (0, 0)),
        pl.BlockSpec((1, C), lambda b, w: (0, 0)),
        pl.BlockSpec((num_heads, N, N), lambda b, w: (0, 0, 0)),
    ]
    args = [xw, p["norm1_g"].reshape(1, C), p["norm1_b"].reshape(1, C),
            ap["qkv_w"], ap["qkv_b"].reshape(1, 3 * C),
            ap["proj_w"], ap["proj_b"].reshape(1, C),
            ap["rel_bias"]]
    if has_mask:
        in_specs.append(pl.BlockSpec((wt, N, N), lambda b, w: (w, 0, 0)))
        args.append(mask)

    return pl.pallas_call(
        kern,
        out_shape=jax.ShapeDtypeStruct((B, nW, N, C), xw.dtype),
        grid=(B, nW // wt),
        in_specs=in_specs,
        out_specs=pl.BlockSpec((1, wt, N, C), lambda b, w: (b, w, 0, 0)),
        compiler_params=_cparams(2),
    )(*args)


def fused_mlp_block(x2d, p):
    M, C = x2d.shape
    hidden = p["fc1_w"].shape[1]
    tm, m_pad = _row_plan(M)
    xp = _pad_rows(x2d, m_pad)
    out = pl.pallas_call(
        functools.partial(_mlp_block_kernel, eps=LN_EPS),
        out_shape=jax.ShapeDtypeStruct((m_pad, C), x2d.dtype),
        grid=(m_pad // tm,),
        in_specs=[
            pl.BlockSpec((tm, C), lambda i: (i, 0)),
            pl.BlockSpec((1, C), lambda i: (0, 0)),
            pl.BlockSpec((1, C), lambda i: (0, 0)),
            pl.BlockSpec((C, hidden), lambda i: (0, 0)),
            pl.BlockSpec((1, hidden), lambda i: (0, 0)),
            pl.BlockSpec((hidden, C), lambda i: (0, 0)),
            pl.BlockSpec((1, C), lambda i: (0, 0)),
        ],
        out_specs=pl.BlockSpec((tm, C), lambda i: (i, 0)),
        compiler_params=_cparams(1),
    )(xp, p["norm2_g"].reshape(1, C), p["norm2_b"].reshape(1, C),
      p["fc1_w"], p["fc1_b"].reshape(1, hidden),
      p["fc2_w"], p["fc2_b"].reshape(1, C))
    return out[:M] if m_pad != M else out


def fused_ln_linear(x2d, g, b, w, bias=None, do_ln=True):
    M, K = x2d.shape
    N = w.shape[1]
    tm, m_pad = _row_plan(M)
    xp = _pad_rows(x2d, m_pad)
    g2 = jnp.ones((1, K), x2d.dtype) if g is None else g.reshape(1, K)
    b2 = jnp.zeros((1, K), x2d.dtype) if b is None else b.reshape(1, K)
    bias2 = jnp.zeros((1, N), x2d.dtype) if bias is None else bias.reshape(1, N)
    out = pl.pallas_call(
        functools.partial(_ln_linear_kernel, eps=LN_EPS, do_ln=do_ln),
        out_shape=jax.ShapeDtypeStruct((m_pad, N), x2d.dtype),
        grid=(m_pad // tm,),
        in_specs=[
            pl.BlockSpec((tm, K), lambda i: (i, 0)),
            pl.BlockSpec((1, K), lambda i: (0, 0)),
            pl.BlockSpec((1, K), lambda i: (0, 0)),
            pl.BlockSpec((K, N), lambda i: (0, 0)),
            pl.BlockSpec((1, N), lambda i: (0, 0)),
        ],
        out_specs=pl.BlockSpec((tm, N), lambda i: (i, 0)),
        compiler_params=_cparams(1),
    )(xp, g2, b2, w, bias2)
    return out[:M] if m_pad != M else out


def fused_linear_ln(x2d, w, bias, g, b, do_ln=True):
    M, K = x2d.shape
    N = w.shape[1]
    tm, m_pad = _row_plan(M)
    xp = _pad_rows(x2d, m_pad)
    bias2 = jnp.zeros((1, N), x2d.dtype) if bias is None else bias.reshape(1, N)
    g2 = jnp.ones((1, N), x2d.dtype) if g is None else g.reshape(1, N)
    b2 = jnp.zeros((1, N), x2d.dtype) if b is None else b.reshape(1, N)
    out = pl.pallas_call(
        functools.partial(_linear_ln_kernel, eps=LN_EPS, do_ln=do_ln),
        out_shape=jax.ShapeDtypeStruct((m_pad, N), x2d.dtype),
        grid=(m_pad // tm,),
        in_specs=[
            pl.BlockSpec((tm, K), lambda i: (i, 0)),
            pl.BlockSpec((K, N), lambda i: (0, 0)),
            pl.BlockSpec((1, N), lambda i: (0, 0)),
            pl.BlockSpec((1, N), lambda i: (0, 0)),
            pl.BlockSpec((1, N), lambda i: (0, 0)),
        ],
        out_specs=pl.BlockSpec((tm, N), lambda i: (i, 0)),
        compiler_params=_cparams(1),
    )(xp, w, bias2, g2, b2)
    return out[:M] if m_pad != M else out


def fused_ln_concat_linear(t2d, skip2d, g, b, w, bias):
    M, D = t2d.shape
    tm, m_pad = _row_plan(M)
    tp = _pad_rows(t2d, m_pad)
    sp = _pad_rows(skip2d, m_pad)
    out = pl.pallas_call(
        functools.partial(_ln_concat_linear_kernel, eps=LN_EPS, dsplit=D),
        out_shape=jax.ShapeDtypeStruct((m_pad, D), t2d.dtype),
        grid=(m_pad // tm,),
        in_specs=[
            pl.BlockSpec((tm, D), lambda i: (i, 0)),
            pl.BlockSpec((tm, D), lambda i: (i, 0)),
            pl.BlockSpec((1, D), lambda i: (0, 0)),
            pl.BlockSpec((1, D), lambda i: (0, 0)),
            pl.BlockSpec((2 * D, D), lambda i: (0, 0)),
            pl.BlockSpec((1, D), lambda i: (0, 0)),
        ],
        out_specs=pl.BlockSpec((tm, D), lambda i: (i, 0)),
        compiler_params=_cparams(1),
    )(tp, sp, g.reshape(1, D), b.reshape(1, D), w, bias.reshape(1, D))
    return out[:M] if m_pad != M else out


def fused_output_head(feat, residual, g, b, w_out):
    # feat (B, HW, D), residual (B, 1, HW) -> out (B, 1, HW); tiled over HW, lane-dense stores.
    B, HW, D = feat.shape
    T = _head_tile(HW)
    return pl.pallas_call(
        functools.partial(_head_kernel, eps=LN_EPS),
        out_shape=jax.ShapeDtypeStruct((B, 1, HW), feat.dtype),
        grid=(B, HW // T),
        in_specs=[
            pl.BlockSpec((1, T, D), lambda i, j: (i, j, 0)),
            pl.BlockSpec((1, D), lambda i, j: (0, 0)),
            pl.BlockSpec((1, D), lambda i, j: (0, 0)),
            pl.BlockSpec((1, D), lambda i, j: (0, 0)),
            pl.BlockSpec((1, 1, T), lambda i, j: (i, 0, j)),
        ],
        out_specs=pl.BlockSpec((1, 1, T), lambda i, j: (i, 0, j)),
        compiler_params=_cparams(2),
    )(feat, g.reshape(1, D), b.reshape(1, D), w_out.reshape(1, D), residual)


# ----------------------------------------------------------------------------
# JAX glue (rolls / window partition / pixel shuffles are pure permutations)
# ----------------------------------------------------------------------------
def swin_block(t, p, input_resolution, num_heads):
    H, W = input_resolution
    B, L, C = t.shape
    ws, ss = p["window_size"], p["shift_size"]

    x = t.reshape(B, H, W, C)
    if ss > 0:
        x = jnp.roll(x, shift=(-ss, -ss), axis=(1, 2))
    xw = x.reshape(B, H // ws, ws, W // ws, ws, C).transpose(0, 1, 3, 2, 4, 5)
    xw = xw.reshape(B, (H // ws) * (W // ws), ws * ws, C)

    yw = fused_window_attn_block(xw, p, num_heads)      # residual already added inside

    y = yw.reshape(B, H // ws, W // ws, ws, ws, C).transpose(0, 1, 3, 2, 4, 5)
    y = y.reshape(B, H, W, C)
    if ss > 0:
        y = jnp.roll(y, shift=(ss, ss), axis=(1, 2))
    t = y.reshape(B, L, C)

    return fused_mlp_block(t.reshape(B * L, C), p).reshape(B, L, C)


def patch_merging(t, p, cur_res):
    H, W = cur_res
    B, L, C = t.shape
    x = t.reshape(B, H, W, C)
    x0 = x[:, 0::2, 0::2, :]
    x1 = x[:, 1::2, 0::2, :]
    x2 = x[:, 0::2, 1::2, :]
    x3 = x[:, 1::2, 1::2, :]
    xm = jnp.concatenate([x0, x1, x2, x3], axis=-1).reshape(B * (L // 4), 4 * C)
    y = fused_ln_linear(xm, p["norm_g"], p["norm_b"], p["red_w"], None, do_ln=True)
    return y.reshape(B, L // 4, 2 * C)


def pixel_shuffle(y, hw, r):
    # 'b h w (p1 p2 c) -> b (h p1) (w p2) c' flattened to (B, L_out, c)
    H, W = hw
    B, L, Cy = y.shape
    c = Cy // (r * r)
    y = y.reshape(B, H, W, r, r, c).transpose(0, 1, 3, 2, 4, 5)
    return y.reshape(B, H * r * W * r, c)


def swin_unet_forward(x, params, cfg):
    res = cfg.patches_resolution
    nl = len(cfg.depths)
    B, Cin, Himg, Wimg = x.shape
    ps = cfg.patch_size
    ph, pw = Himg // ps, Wimg // ps

    # ---- patch embed (conv-as-matmul + optional LN, fused) ----
    pe = params["patch_embed"]
    xp = x.reshape(B, Cin, ph, ps, pw, ps).transpose(0, 2, 4, 1, 3, 5)
    xp = xp.reshape(B * ph * pw, Cin * ps * ps)
    t = fused_linear_ln(xp, pe["proj_w_mat"], pe["proj_b"],
                        pe["norm_g"] if cfg.patch_norm else None,
                        pe["norm_b"] if cfg.patch_norm else None,
                        do_ln=cfg.patch_norm)
    t = t.reshape(B, ph * pw, cfg.embed_dim)

    # ---- encoder ----
    x_downsample = []
    for i in range(nl):
        lp = params["layers"][i]
        cur_res = (res[0] // 2 ** i, res[1] // 2 ** i)
        x_downsample.append(t)
        for bp in lp["blocks"]:
            t = swin_block(t, bp, cur_res, cfg.num_heads[i])
        if i < nl - 1:
            t = patch_merging(t, lp["downsample"], cur_res)

    # ---- decoder ----
    pending_norm = None   # LN of the patch-expand that produced the current t (fused forward)
    for i in range(nl):
        if i == 0:
            bres = (res[0] // 2 ** (nl - 1), res[1] // 2 ** (nl - 1))
            dimb = cfg.embed_dim * 2 ** (nl - 1)
            up0 = params["layers_up"][0]
            Bc, L, C = t.shape
            # encoder-final norm fused with the bottleneck expand linear
            y = fused_ln_linear(t.reshape(Bc * L, C), params["norm_g"], params["norm_b"],
                                up0["expand_w"], None, do_ln=True)
            t = pixel_shuffle(y.reshape(Bc, L, 2 * dimb), bres, 2)
            pending_norm = (up0["norm_g"], up0["norm_b"])
        else:
            cur_res = (res[0] // 2 ** (nl - 1 - i), res[1] // 2 ** (nl - 1 - i))
            dim = cfg.embed_dim * 2 ** (nl - 1 - i)
            skip = x_downsample[nl - 1 - i]
            cb = params["concat_back_dim"][i]
            Bc, L, C = t.shape
            # expand-LN + skip concat + concat_back linear fused (no HBM concat)
            t = fused_ln_concat_linear(t.reshape(Bc * L, C), skip.reshape(Bc * L, C),
                                       pending_norm[0], pending_norm[1],
                                       cb["w"], cb["b"]).reshape(Bc, L, dim)
            lp = params["layers_up"][i]
            for bp in lp["blocks"]:
                t = swin_block(t, bp, cur_res, cfg.num_heads[nl - 1 - i])
            if i < nl - 1:
                up = lp["upsample"]
                Bc, L, C = t.shape
                y = fused_ln_linear(t.reshape(Bc * L, C), None, None,
                                    up["expand_w"], None, do_ln=False)
                t = pixel_shuffle(y.reshape(Bc, L, 2 * dim), cur_res, 2)
                pending_norm = (up["norm_g"], up["norm_b"])

    # ---- norm_up + final x4 expand (fused); its post-LN is fused into the head ----
    upx = params["up"]
    Bc, L, C = t.shape
    y = fused_ln_linear(t.reshape(Bc * L, C), params["norm_up_g"], params["norm_up_b"],
                        upx["expand_w"], None, do_ln=True)
    feat = pixel_shuffle(y.reshape(Bc, L, 16 * C), res, 4)   # (B, 16L, embed_dim), pre-LN
    return feat, (upx["norm_g"], upx["norm_b"])


def swin_unet_residual_forward(x, params, cfg):
    assert cfg.num_classes == 1
    B, Cin, Himg, Wimg = x.shape
    Hf, Wf = cfg.patches_resolution[0] * 4, cfg.patches_resolution[1] * 4
    assert (Hf, Wf) == (Himg, Wimg), "residual add requires patch_size == 4"
    feat, (ng, nb) = swin_unet_forward(x, params, cfg)
    residual = x[:, 0, :, :].reshape(B, 1, Hf * Wf)
    out = fused_output_head(feat, residual, ng, nb, params["output_w"])   # (B, 1, HW)
    return out.reshape(B, 1, Hf, Wf)


# ----------------------------------------------------------------------------
# Deterministic parameter construction (synthetic init, no checkpoint load)
# ----------------------------------------------------------------------------
class KeyGen:
    def __init__(self, seed):
        self.key = jax.random.PRNGKey(seed)

    def __call__(self):
        self.key, sub = jax.random.split(self.key)
        return sub


def trunc_normal(kg, shape, std=0.02):
    return jax.random.truncated_normal(kg(), -2.0, 2.0, shape, jnp.float32) * std


def compute_rel_index(ws):
    coords = np.stack(np.meshgrid(np.arange(ws), np.arange(ws), indexing="ij"))
    cf = coords.reshape(2, -1)
    rel = (cf[:, :, None] - cf[:, None, :]).transpose(1, 2, 0).astype(np.int64)
    rel[:, :, 0] += ws - 1
    rel[:, :, 1] += ws - 1
    rel[:, :, 0] *= 2 * ws - 1
    return jnp.asarray(rel.sum(-1))                              # (N, N)


def compute_attn_mask(H, W, ws, shift):
    if shift == 0:
        return None
    img_mask = np.zeros((1, H, W, 1), np.float32)
    cnt = 0
    for hs in (slice(0, -ws), slice(-ws, -shift), slice(-shift, None)):
        for wsl in (slice(0, -ws), slice(-ws, -shift), slice(-shift, None)):
            img_mask[:, hs, wsl, :] = cnt
            cnt += 1
    mw = img_mask.reshape(1, H // ws, ws, W // ws, ws, 1)
    mw = mw.transpose(0, 1, 3, 2, 4, 5).reshape(-1, ws * ws)
    am = mw[:, None, :] - mw[:, :, None]
    return jnp.asarray(np.where(am != 0, -100.0, 0.0).astype(np.float32))


def init_block(kg, dim, input_resolution, num_heads, window_size, shift_size, mlp_ratio):
    ws, ss = window_size, shift_size
    if min(input_resolution) <= ws:                    # SwinTransformerBlock small-res rule
        ss = 0
        ws = min(input_resolution)
    hidden = int(dim * mlp_ratio)
    N = ws * ws
    # relative-position bias precomputed once to (nH, N, N) -- no per-forward gather
    table = trunc_normal(kg, ((2 * ws - 1) ** 2, num_heads))
    rel_index = compute_rel_index(ws)
    rel_bias = table[rel_index.reshape(-1)].reshape(N, N, num_heads).transpose(2, 0, 1)
    return {
        "window_size": ws,
        "shift_size": ss,
        "attn_mask": compute_attn_mask(input_resolution[0], input_resolution[1], ws, ss),
        "norm1_g": jnp.ones((dim,)), "norm1_b": jnp.zeros((dim,)),
        "norm2_g": jnp.ones((dim,)), "norm2_b": jnp.zeros((dim,)),
        "attn": {
            "qkv_w": _bf16(trunc_normal(kg, (dim, 3 * dim))), "qkv_b": jnp.zeros((3 * dim,)),
            "proj_w": _bf16(trunc_normal(kg, (dim, dim))), "proj_b": jnp.zeros((dim,)),
            "rel_bias": rel_bias,
        },
        "fc1_w": _bf16(trunc_normal(kg, (dim, hidden))), "fc1_b": jnp.zeros((hidden,)),
        "fc2_w": _bf16(trunc_normal(kg, (hidden, dim))), "fc2_b": jnp.zeros((dim,)),
    }


def init_params(cfg, kg):
    res = cfg.patches_resolution
    nl = len(cfg.depths)
    pe_w = trunc_normal(kg, (cfg.embed_dim, cfg.in_chans, cfg.patch_size, cfg.patch_size))
    params = {
        "patch_embed": {
            "proj_w_mat": _bf16(pe_w.reshape(cfg.embed_dim, -1).T),   # (Cin*ps*ps, E) bf16
            "proj_b": jnp.zeros((cfg.embed_dim,)),
            "norm_g": jnp.ones((cfg.embed_dim,)), "norm_b": jnp.zeros((cfg.embed_dim,)),
        }
    }
    layers = []
    for i in range(nl):
        dim = cfg.embed_dim * 2 ** i
        r = (res[0] // 2 ** i, res[1] // 2 ** i)
        blocks = [
            init_block(kg, dim, r, cfg.num_heads[i], cfg.window_size,
                       0 if b % 2 == 0 else cfg.window_size // 2, cfg.mlp_ratio)
            for b in range(cfg.depths[i])
        ]
        layer = {"blocks": blocks}
        if i < nl - 1:
            layer["downsample"] = {
                "norm_g": jnp.ones((4 * dim,)), "norm_b": jnp.zeros((4 * dim,)),
                "red_w": _bf16(trunc_normal(kg, (4 * dim, 2 * dim))),
            }
        layers.append(layer)
    params["layers"] = layers

    layers_up, concat_back = [], []
    for i in range(nl):
        dim = cfg.embed_dim * 2 ** (nl - 1 - i)
        r = (res[0] // 2 ** (nl - 1 - i), res[1] // 2 ** (nl - 1 - i))
        concat_back.append(None if i == 0 else
                           {"w": _bf16(trunc_normal(kg, (2 * dim, dim))),
                            "b": jnp.zeros((dim,))})
        if i == 0:
            layers_up.append({"expand_w": _bf16(trunc_normal(kg, (dim, 2 * dim))),
                              "norm_g": jnp.ones((dim // 2,)),
                              "norm_b": jnp.zeros((dim // 2,))})
        else:
            blocks = [
                init_block(kg, dim, r, cfg.num_heads[nl - 1 - i], cfg.window_size,
                           0 if b % 2 == 0 else cfg.window_size // 2, cfg.mlp_ratio)
                for b in range(cfg.depths[nl - 1 - i])
            ]
            lup = {"blocks": blocks}
            if i < nl - 1:
                lup["upsample"] = {"expand_w": _bf16(trunc_normal(kg, (dim, 2 * dim))),
                                   "norm_g": jnp.ones((dim // 2,)),
                                   "norm_b": jnp.zeros((dim // 2,))}
            layers_up.append(lup)
    params["layers_up"] = layers_up
    params["concat_back_dim"] = concat_back

    nf = cfg.embed_dim * 2 ** (nl - 1)
    params["norm_g"], params["norm_b"] = jnp.ones((nf,)), jnp.zeros((nf,))
    params["norm_up_g"], params["norm_up_b"] = (jnp.ones((cfg.embed_dim,)),
                                                jnp.zeros((cfg.embed_dim,)))
    params["up"] = {"expand_w": _bf16(trunc_normal(kg, (cfg.embed_dim, 16 * cfg.embed_dim))),
                    "norm_g": jnp.ones((cfg.embed_dim,)),
                    "norm_b": jnp.zeros((cfg.embed_dim,))}
    params["output_w"] = trunc_normal(kg, (cfg.embed_dim, cfg.num_classes))
    return params


# ----------------------------------------------------------------------------
# Small synthetic config (stands in for config.MODEL.SWIN.* at reduced scale)
# ----------------------------------------------------------------------------
class Cfg:
    img_size = 16
    patch_size = 4
    in_chans = 4
    embed_dim = 32
    depths = (2, 2)          # encoder (decoder reuses depths like the reference repo)
    num_heads = (2, 4)
    window_size = 2
    mlp_ratio = 4.0
    qkv_bias = True
    ape = False
    patch_norm = True
    num_classes = 1          # SwinUnetResidual passes num_classes=1

    @property
    def patches_resolution(self):
        return (self.img_size // self.patch_size, self.img_size // self.patch_size)


if __name__ == "__main__":
    cfg = Cfg()
    params = init_params(cfg, KeyGen(0))
    x = jax.random.normal(jax.random.PRNGKey(0),
                          (2, cfg.in_chans, cfg.img_size, cfg.img_size), jnp.float32)

    out = swin_unet_residual_forward(x, params, cfg)
    out = jax.block_until_ready(out)

    assert out.shape == (2, 1, cfg.img_size, cfg.img_size), out.shape
    assert bool(jnp.all(jnp.isfinite(out)))
    print("KERNEL_OK")
</pallas_src>

<mosaic_0001>
module attributes {stable_mosaic.version = 11 : i64} {
  func.func @_linear_ln_kernel(%arg0: i32, %arg1: memref<32x64xf32, #tpu.memory_space<vmem>>, %arg2: memref<64x32xbf16, #tpu.memory_space<vmem>>, %arg3: memref<1x32xf32, #tpu.memory_space<vmem>>, %arg4: memref<1x32xf32, #tpu.memory_space<vmem>>, %arg5: memref<1x32xf32, #tpu.memory_space<vmem>>, %arg6: memref<32x32xf32, #tpu.memory_space<vmem>>) attributes {dimension_semantics = [#tpu.dimension_semantics<parallel>], iteration_bounds = array<i64: 1>, scalar_prefetch = 0 : i64, scratch_operands = 0 : i64, tpu.core_type = #tpu.core_type<tc>, window_params = [{transform_indices = @transform_0, window_bounds = array<i64: 32, 64>}, {pipeline_mode = #tpu.pipeline_mode<synchronous>, transform_indices = @transform_1, window_bounds = array<i64: 64, 32>}, {pipeline_mode = #tpu.pipeline_mode<synchronous>, transform_indices = @transform_2, window_bounds = array<i64: 1, 32>}, {pipeline_mode = #tpu.pipeline_mode<synchronous>, transform_indices = @transform_3, window_bounds = array<i64: 1, 32>}, {pipeline_mode = #tpu.pipeline_mode<synchronous>, transform_indices = @transform_4, window_bounds = array<i64: 1, 32>}, {transform_indices = @transform_5, window_bounds = array<i64: 32, 32>}]} {
    %c0 = arith.constant 0 : index
    %c0_0 = arith.constant 0 : index
    %0 = vector.load %arg1[%c0, %c0_0] : memref<32x64xf32, #tpu.memory_space<vmem>>, vector<32x64xf32>
    %1 = arith.truncf %0 : vector<32x64xf32> to vector<32x64xbf16>
    %c0_1 = arith.constant 0 : index
    %c0_2 = arith.constant 0 : index
    %2 = vector.load %arg2[%c0_1, %c0_2] : memref<64x32xbf16, #tpu.memory_space<vmem>>, vector<64x32xbf16>
    %cst = arith.constant dense<0.000000e+00> : vector<32x32xf32>
    %3 = tpu.matmul %1, %2, %cst {dimension_numbers = #tpu.dot_dimension_numbers<[1], [0], [0], [1], [0, 0, 1, 1], [], []>} : vector<32x64xbf16>, vector<64x32xbf16>, vector<32x32xf32> -> vector<32x32xf32>
    %c0_3 = arith.constant 0 : index
    %c0_4 = arith.constant 0 : index
    %4 = vector.load %arg3[%c0_3, %c0_4] : memref<1x32xf32, #tpu.memory_space<vmem>>, vector<1x32xf32>
    %5 = vector.broadcast %4 : vector<1x32xf32> to vector<32x32xf32>
    %6 = arith.addf %3, %5 : vector<32x32xf32>
    %c0_5 = arith.constant 0 : index
    %c0_6 = arith.constant 0 : index
    %7 = vector.load %arg4[%c0_5, %c0_6] : memref<1x32xf32, #tpu.memory_space<vmem>>, vector<1x32xf32>
    %c0_7 = arith.constant 0 : index
    %c0_8 = arith.constant 0 : index
    %8 = vector.load %arg5[%c0_7, %c0_8] : memref<1x32xf32, #tpu.memory_space<vmem>>, vector<1x32xf32>
    %cst_9 = arith.constant dense<0.000000e+00> : vector<32xf32>
    %9 = vector.multi_reduction <add>, %6, %cst_9 [1] : vector<32x32xf32> to vector<32xf32>
    %10 = vector.shape_cast %9 : vector<32xf32> to vector<32x1xf32>
    %cst_10 = arith.constant 3.200000e+01 : f32
    %11 = vector.broadcast %cst_10 : f32 to vector<32x1xf32>
    %12 = arith.divf %10, %11 : vector<32x1xf32>
    %13 = vector.broadcast %12 : vector<32x1xf32> to vector<32x32xf32>
    %14 = arith.subf %6, %13 : vector<32x32xf32>
    %15 = arith.mulf %14, %14 : vector<32x32xf32>
    %cst_11 = arith.constant dense<0.000000e+00> : vector<32xf32>
    %16 = vector.multi_reduction <add>, %15, %cst_11 [1] : vector<32x32xf32> to vector<32xf32>
    %17 = vector.shape_cast %16 : vector<32xf32> to vector<32x1xf32>
    %cst_12 = arith.constant 3.200000e+01 : f32
    %18 = vector.broadcast %cst_12 : f32 to vector<32x1xf32>
    %19 = arith.divf %17, %18 : vector<32x1xf32>
    %cst_13 = arith.constant 9.99999974E-6 : f32
    %20 = vector.broadcast %cst_13 : f32 to vector<32x1xf32>
    %21 = arith.addf %19, %20 : vector<32x1xf32>
    %22 = math.rsqrt %21 : vector<32x1xf32>
    %23 = vector.broadcast %22 : vector<32x1xf32> to vector<32x32xf32>
    %24 = arith.mulf %14, %23 : vector<32x32xf32>
    %25 = vector.broadcast %7 : vector<1x32xf32> to vector<32x32xf32>
    %26 = arith.mulf %24, %25 : vector<32x32xf32>
    %27 = vector.broadcast %8 : vector<1x32xf32> to vector<32x32xf32>
    %28 = arith.addf %26, %27 : vector<32x32xf32>
    %c0_14 = arith.constant 0 : index
    %c0_15 = arith.constant 0 : index
    %29 = vector.load %arg6[%c0_14, %c0_15] : memref<32x32xf32, #tpu.memory_space<vmem>>, vector<32x32xf32>
    tpu.vector_store %arg6[%c0_14, %c0_15], %28 {strides = array<i32>} : memref<32x32xf32, #tpu.memory_space<vmem>>, vector<32x32xf32>,
    return
  }
  func.func @transform_0(%arg0: i32) -> (i32, i32) {
    %c0_i32 = arith.constant 0 : i32
    %c0_i32_0 = arith.constant 0 : i32
    return %arg0, %c0_i32 : i32, i32
  }
  func.func @transform_1(%arg0: i32) -> (i32, i32) {
    %c0_i32 = arith.constant 0 : i32
    %c0_i32_0 = arith.constant 0 : i32
    %c0_i32_1 = arith.constant 0 : i32
    return %c0_i32, %c0_i32_0 : i32, i32
  }
  func.func @transform_2(%arg0: i32) -> (i32, i32) {
    %c0_i32 = arith.constant 0 : i32
    %c0_i32_0 = arith.constant 0 : i32
    %c0_i32_1 = arith.constant 0 : i32
    return %c0_i32, %c0_i32_0 : i32, i32
  }
  func.func @transform_3(%arg0: i32) -> (i32, i32) {
    %c0_i32 = arith.constant 0 : i32
    %c0_i32_0 = arith.constant 0 : i32
    %c0_i32_1 = arith.constant 0 : i32
    return %c0_i32, %c0_i32_0 : i32, i32
  }
  func.func @transform_4(%arg0: i32) -> (i32, i32) {
    %c0_i32 = arith.constant 0 : i32
    %c0_i32_0 = arith.constant 0 : i32
    %c0_i32_1 = arith.constant 0 : i32
    return %c0_i32, %c0_i32_0 : i32, i32
  }
  func.func @transform_5(%arg0: i32) -> (i32, i32) {
    %c0_i32 = arith.constant 0 : i32
    %c0_i32_0 = arith.constant 0 : i32
    return %arg0, %c0_i32 : i32, i32
  }
}

</mosaic_0001>

<llo_original>
// kernel: tpu_custom_call.1
$region0: #{tpu_custom_call.1}
  #allocation0 [shape = 'u32[]', space=smem, size = 0x4, offset = 0x4, fixed_abs, tag = 'smem constant byte address 0x4 - core index']
  #allocation1 [shape = 'u32[144,128]{1,0:T(1,128)}', space=vmem, size = 0x12000, scoped, tag = 'internal scratch']
  %s0 = inlined_call_operand.vmem [shape: f32[32,64], index: 0, kind: input, shape index: {}]
  %s1 = inlined_call_operand.vmem [shape: bf16[64,32], index: 1, kind: input, shape index: {}]
  %s2 = inlined_call_operand.vmem [shape: f32[1,32], index: 2, kind: input, shape index: {}]
  %s3 = inlined_call_operand.vmem [shape: f32[1,32], index: 3, kind: input, shape index: {}]
  %s4 = inlined_call_operand.vmem [shape: f32[1,32], index: 4, kind: input, shape index: {}]
  %s5 = inlined_call_operand.hbm [shape: f32[32,32], index: 5, kind: output, shape index: {}]
  %s6 = sld [smem:[#allocation0]]
  $region30: #{tpu_custom_call.1} parent=0
    _
  %s8 = ssub.s32 1, %s6
  %s9 = scalar_select 0, %s8, %s6
  $region1: #{tpu_custom_call.1} parent=0
    #allocation2 [shape = 'u8[16384]{0}', space=vmem, size = 0x4000, scoped, tag = 'output window, operand 0, single buffered']
    #allocation3 [shape = 's32[1]{0}', space=sflag, size = 0x4, scoped, tag = 'scoped memory for tpu_custom_call.1']
    %10 = vsyncpa [#allocation3], 0
    // Predicated region
    $region2: #{tpu_custom_call.1} parent=1 // pred_check
      _
    $region3: #{tpu_custom_call.1} parent=1 // pred_check_branch
      %12 = sbr.rel (0) target = $region5
    $region4: #{tpu_custom_call.1} parent=1 // pred_region
      _
    $region5: #{tpu_custom_call.1} parent=1 // pred_fallthru
      _
    // Predicated region
    $region6: #{tpu_custom_call.1} parent=1 // pred_check
      _
    $region7: #{tpu_custom_call.1} parent=1 // pred_check_branch
      %14 = sbr.rel (0) target = $region9
    $region8: #{tpu_custom_call.1} parent=1 // pred_region
      _
    $region9: #{tpu_custom_call.1} parent=1 // pred_fallthru
      _
    // Predicated region
    $region10: #{tpu_custom_call.1} parent=1 // pred_check
      _
    $region11: #{tpu_custom_call.1} parent=1 // pred_check_branch
      %16 = sbr.rel (0) target = $region13
    $region12: #{tpu_custom_call.1} parent=1 // pred_region
      _
    $region13: #{tpu_custom_call.1} parent=1 // pred_fallthru
      _
    // Predicated region
    $region14: #{tpu_custom_call.1} parent=1 // pred_check
      _
    $region15: #{tpu_custom_call.1} parent=1 // pred_check_branch
      %18 = sbr.rel (0) target = $region17
    $region16: #{tpu_custom_call.1} parent=1 // pred_region
      _
    $region17: #{tpu_custom_call.1} parent=1 // pred_fallthru
      _
    // Predicated region
    $region18: #{tpu_custom_call.1} parent=1 // pred_check
      _
    $region19: #{tpu_custom_call.1} parent=1 // pred_check_branch
      %20 = sbr.rel (0) target = $region21
    $region20: #{tpu_custom_call.1} parent=1 // pred_region
      _
    $region21: #{tpu_custom_call.1} parent=1 // pred_fallthru
      _
    %v22 = vld [vmem:[%s0] sm:$0xff]
    %v23 = vld [vmem:[%s0 + $0x8] sm:$0xff]
    %v24 = vld [vmem:[%s0 + $0x10] sm:$0xff]
    %v25 = vld [vmem:[%s0 + $0x18] sm:$0xff]
    %v26 = vpack.c.bf16 %v23, %v22
    %v27 = vpack.c.bf16 %v25, %v24
    %v28 = vld [vmem:[%s1] sm:$0xf]
    %v29 = vld [vmem:[%s1 + $0x4] sm:$0xf]
    %v30 = vld [vmem:[%s1 + $0x8] sm:$0xf]
    %v31 = vld [vmem:[%s1 + $0xc] sm:$0xf]
    %v32 = vld [vmem:[%s1 + $0x10] sm:$0xf]
    %v33 = vld [vmem:[%s1 + $0x14] sm:$0xf]
    %v34 = vld [vmem:[%s1 + $0x18] sm:$0xf]
    %v35 = vld [vmem:[%s1 + $0x1c] sm:$0xf]
    %v36 = vld [vmem:[%s2] sm:$0x1]
    %v38 = vlaneseq
    %v39 = vshrl.u32 %v38, 7
    %v40 = vsub.s32 0, %v39
    %v41 = vrot.slane %v36, %v40
    %v51 = vunpack.c.l.b16 %v28
    %v52 = vunpack.c.l.b16 %v29
    %v53 = vunpack.c.l.b16 %v30
    %v54 = vunpack.c.l.b16 %v31
    %v55 = vunpack.c.l.b16 %v32
    %v56 = vunpack.c.l.b16 %v33
    %v57 = vunpack.c.l.b16 %v34
    %v58 = vunpack.c.l.b16 %v35
    %v59 = vpack.c.b16 %v52, %v51
    %v60 = vpack.c.b16 %v54, %v53
    %v61 = vpack.c.b16 %v56, %v55
    %v62 = vpack.c.b16 %v58, %v57
    %vm67 = vcmask 523264
    %v69 = vsel %vm67, %v26, 0
    %v72 = vsel %vm67, %v27, 0
    %74 = vmatprep.subr.bf16.mxu0 0
    %75 = vmatpush1.bf16.msra.mxu0 %v59
    %76 = vmatprep.subr.bf16.mxu0 0
    %77 = vmatpush1.bf16.msra.mxu0 %v60
    %78 = vmatprep.subr.bf16.mxu0 0
    %79 = vmatpush1.bf16.msra.mxu0 %v61
    %80 = vmatprep.subr.bf16.mxu0 0
    %81 = vmatpush1.bf16.msra.mxu0 %v62
    %82 = vmatprep.subr.bf16.mxu0 0
    %83 = vmatpush1.bf16.msra.mxu0 0
    %84 = vmatprep.subr.bf16.mxu0 0
    %85 = vmatpush1.bf16.msra.mxu0 0
    %86 = vmatprep.subr.bf16.mxu0 0
    %87 = vmatpush1.bf16.msra.mxu0 0
    %88 = vmatprep.subr.bf16.mxu0 0
    %89 = vmatpush1.bf16.msra.mxu0 0
    %90 = vmatprep.subr.bf16.mxu0 0
    %91 = vmatpush1.bf16.msra.mxu0 0
    %92 = vmatprep.subr.bf16.mxu0 0
    %93 = vmatpush1.bf16.msra.mxu0 0
    %94 = vmatprep.subr.bf16.mxu0 0
    %95 = vmatpush1.bf16.msra.mxu0 0
    %96 = vmatprep.subr.bf16.mxu0 0
    %97 = vmatpush1.bf16.msra.mxu0 0
    %98 = vmatprep.subr.bf16.mxu0 0
    %99 = vmatpush1.bf16.msra.mxu0 0
    %100 = vmatprep.subr.bf16.mxu0 0
    %101 = vmatpush1.bf16.msra.mxu0 0
    %102 = vmatprep.subr.bf16.mxu0 0
    %103 = vmatpush1.bf16.msra.mxu0 0
    %104 = vmatprep.subr.bf16.mxu0 0
    %105 = vmatpush1.bf16.msra.mxu0 0
    %106 = vmatprep.mubr.bf16.mxu0 0
    %107 = vmatmul.mubr.bf16.gmra.mrb[0].mxu0 %v69
    %v108 = vpop.f32.mrb[0].mxu0
    %v109 = vadd.f32 %v41, %v108
    %v110 = vpop.f32.mrb[0].mxu0
    %v111 = vpop.f32.mrb[0].mxu0
    %v112 = vadd.f32 %v41, %v111
    %v113 = vpop.f32.mrb[0].mxu0
    %114 = vmatprep.mubr.bf16.mxu0 0
    %115 = vmatmul.mubr.bf16.gmra.mrb[0].mxu0 %v72
    %v116 = vpop.f32.mrb[0].mxu0
    %v117 = vadd.f32 %v41, %v116
    %v118 = vpop.f32.mrb[0].mxu0
    %v119 = vpop.f32.mrb[0].mxu0
    %v120 = vadd.f32 %v41, %v119
    %v121 = vpop.f32.mrb[0].mxu0
    %122 = vdwg.mxu0
    %v123 = vld [vmem:[%s3] sm:$0x1]
    %v124 = vld [vmem:[%s4] sm:$0x1]
    %vm125 = vcmask 261120
    %v126 = vsel %vm125, %v109, 0.0
    %127 = vadd.xlane.f32.xlu0 %v126
    %v128 = vpop.xlane.xlu0 %127
    %v129 = vsel %vm125, %v112, 0.0
    %130 = vadd.xlane.f32.xlu0 %v129
    %v131 = vpop.xlane.xlu0 %130
    %v132 = vsel %vm125, %v117, 0.0
    %133 = vadd.xlane.f32.xlu0 %v132
    %v134 = vpop.xlane.xlu0 %133
    %v135 = vsel %vm125, %v120, 0.0
    %136 = vadd.xlane.f32.xlu0 %v135
    %v137 = vpop.xlane.xlu0 %136
    %v138 = vrcp.pop 32.0
    %v139 = vmul.f32 %v128, %v138
    %v140 = vmul.f32 %v131, %v138
    %v141 = vmul.f32 %v134, %v138
    %v142 = vmul.f32 %v137, %v138
    %v143 = vsub.f32 %v109, %v139
    %v144 = vsub.f32 %v112, %v140
    %v145 = vsub.f32 %v117, %v141
    %v146 = vsub.f32 %v120, %v142
    %v147 = vmul.f32 %v143, %v143
    %v148 = vmul.f32 %v144, %v144
    %v149 = vmul.f32 %v145, %v145
    %v150 = vmul.f32 %v146, %v146
    %v151 = vsel %vm125, %v147, 0.0
    %152 = vadd.xlane.f32.xlu0 %v151
    %v153 = vpop.xlane.xlu0 %152
    %v154 = vsel %vm125, %v148, 0.0
    %155 = vadd.xlane.f32.xlu0 %v154
    %v156 = vpop.xlane.xlu0 %155
    %v157 = vsel %vm125, %v149, 0.0
    %158 = vadd.xlane.f32.xlu0 %v157
    %v159 = vpop.xlane.xlu0 %158
    %v160 = vsel %vm125, %v150, 0.0
    %161 = vadd.xlane.f32.xlu0 %v160
    %v162 = vpop.xlane.xlu0 %161
    %v163 = vmul.f32 %v153, %v138
    %v164 = vmul.f32 %v156, %v138
    %v165 = vmul.f32 %v159, %v138
    %v166 = vmul.f32 %v162, %v138
    %v167 = vadd.f32 %v163, 1e-05
    %v168 = vadd.f32 %v164, 1e-05
    %v169 = vadd.f32 %v165, 1e-05
    %v170 = vadd.f32 %v166, 1e-05
    %v171 = vrsqrt.pop %v167
    %v172 = vrsqrt.pop %v168
    %v173 = vrsqrt.pop %v169
    %v174 = vrsqrt.pop %v170
    %v175 = vmul.f32 %v143, %v171
    %v176 = vmul.f32 %v144, %v172
    %v177 = vmul.f32 %v145, %v173
    %v178 = vmul.f32 %v146, %v174
    %v180 = vlaneseq
    %v181 = vshrl.u32 %v180, 7
    %v182 = vsub.s32 0, %v181
    %v183 = vrot.slane %v123, %v182
    %v185 = vmul.f32 %v175, %v183
    %v186 = vmul.f32 %v176, %v183
    %v187 = vmul.f32 %v177, %v183
    %v188 = vmul.f32 %v178, %v183
    %v190 = vlaneseq
    %v191 = vshrl.u32 %v190, 7
    %v192 = vsub.s32 0, %v191
    %v193 = vrot.slane %v124, %v192
    %v195 = vadd.f32 %v185, %v193
    %v196 = vadd.f32 %v186, %v193
    %v197 = vadd.f32 %v187, %v193
    %v198 = vadd.f32 %v188, %v193
    %199 = vst.msk [vmem:[#allocation2] sm:$0xff] %vm125, %v195
    %200 = vst.msk [vmem:[#allocation2 + $0x8] sm:$0xff] %vm125, %v196
    %201 = vst.msk [vmem:[#allocation2 + $0x10] sm:$0xff] %vm125, %v197
    %202 = vst.msk [vmem:[#allocation2 + $0x18] sm:$0xff] %vm125, %v198
    // Predicated region
    $region22: #{tpu_custom_call.1} parent=1 // pred_check
      _
    $region23: #{tpu_custom_call.1} parent=1 // pred_check_branch
      %204 = sbr.rel (0) target = $region25
    $region24: #{tpu_custom_call.1} parent=1 // pred_region
      %s206 = ssub.s32 512, 512
      %207 = vsyncadd [#allocation3], %s206
      %s208 = sshll.u32 [#allocation2], 4
      %s209 = int_to_ptr.vmem [resolvable:$true] %s208
      %214 = dma.vmem_to_hbm [thread:$0]  %s209, 512, %s5, [#allocation3], 128, 128, 8
    $region25: #{tpu_custom_call.1} parent=1 // pred_fallthru
      _
    // Predicated region
    $region26: #{tpu_custom_call.1} parent=1 // pred_check
      _
    $region27: #{tpu_custom_call.1} parent=1 // pred_check_branch
      %216 = sbr.rel (0) target = $region29
    $region28: #{tpu_custom_call.1} parent=1 // pred_region
      %217 = dma.done [#allocation3], 512
    $region29: #{tpu_custom_call.1} parent=1 // pred_fallthru
      _
    %218 = vsyncpa [#allocation3], 1

</llo_original>
